<compile_context>
chip_gen: v5e
topology: v5e:2x2
jax: 0.10.0
libtpu: 0.0.40
codegen_flags: <defaults>
</compile_context>

<pallas_src>
import jax
import jax.numpy as jnp
from jax.experimental import pallas as pl
from jax.experimental.pallas import tpu as pltpu

_SUBLANE = 8      # f32 sublanes per vreg
_LANE = 128       # lanes per vreg

# Untiled (single whole-array block) path is used only while its lane-padded
# VMEM footprint stays <= this. 4 MiB << v5e's 16 MiB scoped-VMEM default.
_UNTILED_MAX_VMEM_BYTES = 4 << 20

# VMEM budget for one pipelined grid step (double-buffered x/out tiles + the
# concat scratch).  Comfortably under every chip's scoped-VMEM default.
_TILE_VMEM_BUDGET_BYTES = 8 << 20


def _round_up(x, m):
    return ((x + m - 1) // m) * m


def _make_actor_decoder_kernel(seg_dims):
    """out = concat(x_0..x_{n-1}, -1) @ W + b, as a single MXU matmul.

    The concat is realized by stitching each segment into a VMEM scratch tile
    via static lane-range stores (plainly lowerable masked stores), so no
    concatenated activation is ever materialized in HBM and the kernel issues
    one K=d_in dot instead of n small dots plus n-1 VPU adds.
    """
    n = len(seg_dims)
    offsets = []
    off = 0
    for d in seg_dims:
        offsets.append(off)
        off += d

    def kernel(*refs):
        x_refs = refs[:n]
        w_ref = refs[n]
        b_ref = refs[n + 1]
        out_ref = refs[n + 2]

        if n == 1:
            x_cat = x_refs[0][...]
        else:
            xcat_ref = refs[n + 3]                      # VMEM scratch (tile_b, d_in)
            for x_ref, o, d in zip(x_refs, offsets, seg_dims):
                xcat_ref[:, o:o + d] = x_ref[...]
            x_cat = xcat_ref[...]

        acc = jnp.dot(x_cat, w_ref[...], preferred_element_type=jnp.float32)
        # Narrow (d_out-lane) store: masked vst, but HBM write bytes are the
        # true output size — no 128-lane padding and no wrapper slice pass.
        out_ref[...] = (acc + b_ref[...].astype(jnp.float32)).astype(out_ref.dtype)

    return kernel


def init_actor_decoder_params(key, input_dim, hidden_dim=128, output_dim=6):
    """Synthetic init mimicking nn.Linear's U(-1/sqrt(fan_in), 1/sqrt(fan_in)).

    Weights are stored pre-transposed as [in, out] (W^T vs PyTorch's [out, in]).
    """
    k1, k2, k3, k4 = jax.random.split(key, 4)
    lim1 = 1.0 / jnp.sqrt(jnp.float32(input_dim))
    lim2 = 1.0 / jnp.sqrt(jnp.float32(hidden_dim))
    w1 = jax.random.uniform(k1, (input_dim, hidden_dim), jnp.float32, -lim1, lim1)
    b1 = jax.random.uniform(k2, (1, hidden_dim), jnp.float32, -lim1, lim1)
    w2 = jax.random.uniform(k3, (hidden_dim, output_dim), jnp.float32, -lim2, lim2)
    b2 = jax.random.uniform(k4, (1, output_dim), jnp.float32, -lim2, lim2)
    return {"w1": w1, "b1": b1, "w2": w2, "b2": b2}


def fold_actor_decoder_params(params, dtype=jnp.float32):
    """Fold Linear(in,128) -> Linear(128,out) into one (in, out) matmul.

    Mathematically exact (no nonlinearity between the layers), done once at
    HIGHEST precision.  Pass dtype=jnp.bfloat16 (with bf16 activations) to
    halve HBM traffic for this memory-bound kernel; accumulation stays f32.
    """
    hp = jax.lax.Precision.HIGHEST
    w = jnp.dot(params["w1"], params["w2"], precision=hp)            # (d_in, d_out)
    b = jnp.dot(params["b1"], params["w2"], precision=hp) + params["b2"]   # (1, d_out)
    return {"w": w.astype(dtype), "b": b.astype(dtype)}


def _choose_batch_tile(batch, per_row_step_bytes, preferred):
    """Largest 8-aligned batch tile that fits the per-step VMEM budget, capped
    so the grid has length >= 2 (keeps both v7x TensorCores busy)."""
    cap_vmem = _TILE_VMEM_BUDGET_BYTES // max(per_row_step_bytes, 1)
    cap_core = batch // 2
    tile = min(preferred, cap_vmem, cap_core)
    return max(_SUBLANE, (tile // _SUBLANE) * _SUBLANE)


def actor_decoder(inputs, folded, *, batch_tile=None):
    """Fused ActorDecoder forward: equivalent to cat(inputs,-1) -> Linear -> Linear."""
    inputs = tuple(inputs)
    assert inputs, "need at least one input"
    w, b = folded["w"], folded["b"]
    d_in, d_out = int(w.shape[0]), int(w.shape[1])

    lead_shape = inputs[0].shape[:-1]
    assert all(x.shape[:-1] == lead_shape for x in inputs)
    x2d = tuple(x.reshape(-1, x.shape[-1]) for x in inputs)
    seg_dims = tuple(int(x.shape[-1]) for x in x2d)
    assert sum(seg_dims) == d_in, "sum of input feature dims must equal input_dim"
    x_dtype = x2d[0].dtype
    assert all(x.dtype == x_dtype for x in x2d), "all inputs must share a dtype"
    batch = int(x2d[0].shape[0])
    n = len(x2d)
    out_dtype = x_dtype

    kernel = _make_actor_decoder_kernel(seg_dims)
    operands = (*x2d, w, b)

    # Lane-padded VMEM bytes per batch row (what actually lands in VMEM).
    row_in = sum(_round_up(d, _LANE) for d in seg_dims) * x_dtype.itemsize
    row_out = _round_up(d_out, _LANE) * out_dtype.itemsize
    row_scratch = (_round_up(d_in, _LANE) * x_dtype.itemsize) if n > 1 else 0
    whole_vmem = (batch * (row_in + row_out + row_scratch)
                  + w.size * w.dtype.itemsize + b.size * b.dtype.itemsize)

    vmem_full = pl.BlockSpec(memory_space=pltpu.MemorySpace.VMEM)

    if whole_vmem <= _UNTILED_MAX_VMEM_BYTES or batch < 2 * _SUBLANE:
        # Small/medium problem: single whole-array VMEM block, no grid machinery.
        # Footprint is capped at 4 MiB so this can never overrun scoped VMEM,
        # even on v5e's 16 MiB default.
        # TODO(synk): at generation time (batch ~ a few rows) this GEMV-sized op
        # should be fused into the producer kernel (or several decoder heads
        # batched into one pallas_call); the standalone launch / DMA-setup
        # overhead dwarfs the ~1 vreg of work and no in-kernel tuning fixes that.
        scratch_shapes = [pltpu.VMEM((batch, d_in), x_dtype)] if n > 1 else []
        out2d = pl.pallas_call(
            kernel,
            out_shape=jax.ShapeDtypeStruct((batch, d_out), out_dtype),
            in_specs=[vmem_full] * len(operands),
            out_specs=vmem_full,
            scratch_shapes=scratch_shapes,
        )(*operands)
    else:
        # Large batch: 1-D grid over rows, double-buffered BlockSpec pipeline.
        per_row_step = 2 * (row_in + row_out) + row_scratch    # 2 = double-buffer
        tile_b = _choose_batch_tile(batch, per_row_step,
                                    preferred=batch_tile if batch_tile else 4096)
        # pl.cdiv grid: ragged batches stay on this pipelined path.  The partial
        # last tile reads some out-of-bounds rows, but those only feed output
        # rows that are clipped on writeback (row-wise independent compute).
        grid = (pl.cdiv(batch, tile_b),)
        x_specs = [pl.BlockSpec((tile_b, d), lambda i: (i, 0)) for d in seg_dims]
        # W and b are grid-invariant: whole-array VMEM residents — fetched once,
        # no per-step DMA descriptors, no double-buffering (supersedes the
        # pl.Buffered(1) suggestion on a blocked spec).
        wb_specs = [vmem_full, vmem_full]
        scratch_shapes = [pltpu.VMEM((tile_b, d_in), x_dtype)] if n > 1 else []
        out2d = pl.pallas_call(
            kernel,
            out_shape=jax.ShapeDtypeStruct((batch, d_out), out_dtype),
            grid=grid,
            in_specs=x_specs + wb_specs,
            out_specs=pl.BlockSpec((tile_b, d_out), lambda i: (i, 0)),
            scratch_shapes=scratch_shapes,
            compiler_params=pltpu.CompilerParams(
                dimension_semantics=("parallel",)),   # v7x: both TCs get tiles
        )(*operands)

    return out2d.reshape(*lead_shape, d_out)


if __name__ == "__main__":
    key = jax.random.PRNGKey(0)
    k_in1, k_in2, k_params, k_b1, k_b2 = jax.random.split(key, 5)

    batch = 2
    d1, d2 = 16, 16
    input_dim = d1 + d2
    output_dim = 6

    x1 = jax.random.normal(k_in1, (batch, d1), jnp.float32)
    x2 = jax.random.normal(k_in2, (batch, d2), jnp.float32)
    params = init_actor_decoder_params(k_params, input_dim, 128, output_dim)
    folded = fold_actor_decoder_params(params)

    out = jax.block_until_ready(actor_decoder([x1, x2], folded))
    assert out.shape == (batch, output_dim)

    # Check 1: kernel vs a plain-JAX reference of the same folded computation.
    # Tolerance covers only MXU multi-pass f32 rounding differences between the
    # Pallas dot and the XLA dot; any indexing/stitching bug would be O(1).
    x_cat = jnp.concatenate([x1, x2], axis=-1)
    ref_folded = x_cat @ folded["w"] + folded["b"]
    assert jnp.allclose(out, ref_folded, atol=1e-4, rtol=1e-4)

    # Check 2: vs the original two-Linear semantics.  The fold is mathematically
    # exact; the looser tolerance only covers TPU default-precision matmul
    # rounding / reassociation of the reference path.
    ref_two_layer = (x_cat @ params["w1"] + params["b1"]) @ params["w2"] + params["b2"]
    assert jnp.allclose(out, ref_two_layer, atol=2e-2, rtol=2e-2)

    # Also exercise the large, RAGGED batch -> tiled pipelined "parallel" path
    # (grid = pl.cdiv(4101, tile) = 3, partial last tile clipped on writeback).
    big = 4101
    xb1 = jax.random.normal(k_b1, (big, d1), jnp.float32)
    xb2 = jax.random.normal(k_b2, (big, d2), jnp.float32)
    out_big = jax.block_until_ready(actor_decoder([xb1, xb2], folded))
    ref_big = jnp.concatenate([xb1, xb2], axis=-1) @ folded["w"] + folded["b"]
    assert out_big.shape == (big, output_dim)
    assert jnp.allclose(out_big, ref_big, atol=1e-4, rtol=1e-4)

    print("KERNEL_OK")
</pallas_src>

<mosaic_0001>
module attributes {stable_mosaic.version = 11 : i64} {
  func.func @kernel(%arg0: memref<2x16xf32, #tpu.memory_space<vmem>>, %arg1: memref<2x16xf32, #tpu.memory_space<vmem>>, %arg2: memref<32x6xf32, #tpu.memory_space<vmem>>, %arg3: memref<1x6xf32, #tpu.memory_space<vmem>>, %arg4: memref<2x6xf32, #tpu.memory_space<vmem>>, %arg5: memref<2x32xf32, #tpu.memory_space<vmem>>) attributes {dimension_semantics = [], scalar_prefetch = 0 : i64, scratch_operands = 1 : i64, tpu.core_type = #tpu.core_type<tc>} {
    %c0 = arith.constant 0 : index
    %c0_0 = arith.constant 0 : index
    %0 = vector.load %arg0[%c0, %c0_0] : memref<2x16xf32, #tpu.memory_space<vmem>>, vector<2x16xf32>
    %c0_1 = arith.constant 0 : index
    %c0_2 = arith.constant 0 : index
    %1 = vector.load %arg5[%c0_1, %c0_2] : memref<2x32xf32, #tpu.memory_space<vmem>>, vector<2x16xf32>
    tpu.vector_store %arg5[%c0_1, %c0_2], %0 {strides = array<i32>} : memref<2x32xf32, #tpu.memory_space<vmem>>, vector<2x16xf32>,
    %c0_3 = arith.constant 0 : index
    %c0_4 = arith.constant 0 : index
    %2 = vector.load %arg1[%c0_3, %c0_4] : memref<2x16xf32, #tpu.memory_space<vmem>>, vector<2x16xf32>
    %c0_5 = arith.constant 0 : index
    %c16 = arith.constant 16 : index
    %3 = vector.load %arg5[%c0_5, %c16] : memref<2x32xf32, #tpu.memory_space<vmem>>, vector<2x16xf32>
    tpu.vector_store %arg5[%c0_5, %c16], %2 {strides = array<i32>} : memref<2x32xf32, #tpu.memory_space<vmem>>, vector<2x16xf32>,
    %c0_6 = arith.constant 0 : index
    %c0_7 = arith.constant 0 : index
    %4 = vector.load %arg5[%c0_6, %c0_7] : memref<2x32xf32, #tpu.memory_space<vmem>>, vector<2x32xf32>
    %c0_8 = arith.constant 0 : index
    %c0_9 = arith.constant 0 : index
    %5 = vector.load %arg2[%c0_8, %c0_9] : memref<32x6xf32, #tpu.memory_space<vmem>>, vector<32x6xf32>
    %cst = arith.constant dense<0.000000e+00> : vector<2x6xf32>
    %6 = tpu.matmul %4, %5, %cst {dimension_numbers = #tpu.dot_dimension_numbers<[1], [0], [0], [1], [0, 0, 1, 1], [], []>} : vector<2x32xf32>, vector<32x6xf32>, vector<2x6xf32> -> vector<2x6xf32>
    %c0_10 = arith.constant 0 : index
    %c0_11 = arith.constant 0 : index
    %7 = vector.load %arg3[%c0_10, %c0_11] : memref<1x6xf32, #tpu.memory_space<vmem>>, vector<1x6xf32>
    %8 = vector.broadcast %7 : vector<1x6xf32> to vector<2x6xf32>
    %9 = arith.addf %6, %8 : vector<2x6xf32>
    %c0_12 = arith.constant 0 : index
    %c0_13 = arith.constant 0 : index
    %10 = vector.load %arg4[%c0_12, %c0_13] : memref<2x6xf32, #tpu.memory_space<vmem>>, vector<2x6xf32>
    tpu.vector_store %arg4[%c0_12, %c0_13], %9 {strides = array<i32>} : memref<2x6xf32, #tpu.memory_space<vmem>>, vector<2x6xf32>,
    return
  }
}

</mosaic_0001>

<llo_original>
// kernel: tpu_custom_call.1
$region0: #{tpu_custom_call.1}
  #allocation0 [shape = 'u32[]', space=smem, size = 0x4, offset = 0x4, fixed_abs, tag = 'smem constant byte address 0x4 - core index']
  #allocation1 [shape = 'u32[72,128]{1,0:T(1,128)}', space=vmem, size = 0x9000, scoped, tag = 'internal scratch']
  #allocation2 [shape = 'f32[2,32]{1,0:T(2,128)}', space=vmem, size = 0x400, scoped, tag = 'scratch operand']
  %s0 = inlined_call_operand.vmem [shape: f32[2,16], index: 0, kind: input, shape index: {}]
  %s1 = inlined_call_operand.vmem [shape: f32[2,16], index: 1, kind: input, shape index: {}]
  %s2 = inlined_call_operand.vmem [shape: f32[32,6], index: 2, kind: input, shape index: {}]
  %s3 = inlined_call_operand.vmem [shape: f32[1,6], index: 3, kind: input, shape index: {}]
  %s4 = inlined_call_operand.hbm [shape: f32[2,6], index: 4, kind: output, shape index: {}]
  %s5 = sld [smem:[#allocation0]]
  $region26: #{tpu_custom_call.1} parent=0
    _
  %s7 = ssub.s32 1, %s5
  %s8 = scalar_select 0, %s7, %s5
  $region1: #{tpu_custom_call.1} parent=0
    #allocation3 [shape = 'u8[1024]{0}', space=vmem, size = 0x400, scoped, tag = 'output window, operand 0, single buffered']
    #allocation4 [shape = 's32[1]{0}', space=sflag, size = 0x4, scoped, tag = 'scoped memory for tpu_custom_call.1']
    %9 = vsyncpa [#allocation4], 0
    // Predicated region
    $region2: #{tpu_custom_call.1} parent=1 // pred_check
      _
    $region3: #{tpu_custom_call.1} parent=1 // pred_check_branch
      %11 = sbr.rel (0) target = $region5
    $region4: #{tpu_custom_call.1} parent=1 // pred_region
      _
    $region5: #{tpu_custom_call.1} parent=1 // pred_fallthru
      _
    // Predicated region
    $region6: #{tpu_custom_call.1} parent=1 // pred_check
      _
    $region7: #{tpu_custom_call.1} parent=1 // pred_check_branch
      %13 = sbr.rel (0) target = $region9
    $region8: #{tpu_custom_call.1} parent=1 // pred_region
      _
    $region9: #{tpu_custom_call.1} parent=1 // pred_fallthru
      _
    // Predicated region
    $region10: #{tpu_custom_call.1} parent=1 // pred_check
      _
    $region11: #{tpu_custom_call.1} parent=1 // pred_check_branch
      %15 = sbr.rel (0) target = $region13
    $region12: #{tpu_custom_call.1} parent=1 // pred_region
      _
    $region13: #{tpu_custom_call.1} parent=1 // pred_fallthru
      _
    // Predicated region
    $region14: #{tpu_custom_call.1} parent=1 // pred_check
      _
    $region15: #{tpu_custom_call.1} parent=1 // pred_check_branch
      %17 = sbr.rel (0) target = $region17
    $region16: #{tpu_custom_call.1} parent=1 // pred_region
      _
    $region17: #{tpu_custom_call.1} parent=1 // pred_fallthru
      _
    %v18 = vld [vmem:[%s0] sm:$0x3]
    %vm19 = vcmask 123904
    %20 = vst.msk [vmem:[#allocation2] sm:$0x3] %vm19, %v18
    %v21 = vld [vmem:[%s1] sm:$0x3]
    %23 = vrot.lane.b32.xlu0 %v21, 16
    %v24 = vpop.permute.xlu0 %23
    %vm26 = vcmask 255104
    %27 = vst.msk [vmem:[#allocation2] sm:$0x3] %vm26, %v24
    %v28 = vld [vmem:[#allocation2] sm:$0x3]
    %v29 = vld [vmem:[%s2] sm:$0xff]
    %v30 = vld [vmem:[%s2 + $0x8] sm:$0xff]
    %v31 = vld [vmem:[%s2 + $0x10] sm:$0xff]
    %v32 = vld [vmem:[%s2 + $0x18] sm:$0xff]
    %v33 = vld [vmem:[%s3] sm:$0x1]
    %v35 = vperm.slane %v33, 0
    %vm37 = vcmask 261120
    %v39 = vsel %vm37, %v28, 0
    %41 = vmatpush.msra.mxu0 0.0
    %42 = vmatpush.msra.mxu0 0.0
    %43 = vmatpush.msra.mxu0 0.0
    %44 = vmatpush.msra.mxu0 0.0
    %45 = vmatpush.msra.mxu0 0.0
    %46 = vmatpush.msra.mxu0 0.0
    %47 = vmatpush.msra.mxu0 0.0
    %48 = vmatpush.msra.mxu0 0.0
    %49 = vmatpush.msra.mxu0 0.0
    %50 = vmatpush.msra.mxu0 0.0
    %51 = vmatpush.msra.mxu0 0.0
    %52 = vmatpush.msra.mxu0 0.0
    %53 = vmatpush.msra.mxu0 %v32
    %54 = vmatpush.msra.mxu0 %v31
    %55 = vmatpush.msra.mxu0 %v30
    %56 = vmatpush.msra.mxu0 %v29
    %57 = vmatmul.f32.gmra.mxu0 %v39
    %v58 = vpop.f32.mrf.mxu0
    %v59 = vadd.f32 %v35, %v58
    %60 = vdwg.mxu0
    %vm61 = vcmask 41984
    %62 = vst.msk [vmem:[#allocation3] sm:$0x3] %vm61, %v59
    // Predicated region
    $region18: #{tpu_custom_call.1} parent=1 // pred_check
      _
    $region19: #{tpu_custom_call.1} parent=1 // pred_check_branch
      %64 = sbr.rel (0) target = $region21
    $region20: #{tpu_custom_call.1} parent=1 // pred_region
      %66 = vsyncadd [#allocation4], 0
      %s68 = sshll.u32 [#allocation3], 4
      %s69 = int_to_ptr.vmem [resolvable:$true] %s68
      %s70 = sshll.u32 %s4, 4
      %s71 = int_to_ptr.hbm [resolvable:$true] %s70
      %73 = dma.vmem_to_hbm [thread:$0]  %s69, 32, %s71, [#allocation4]
    $region21: #{tpu_custom_call.1} parent=1 // pred_fallthru
      _
    // Predicated region
    $region22: #{tpu_custom_call.1} parent=1 // pred_check
      _
    $region23: #{tpu_custom_call.1} parent=1 // pred_check_branch
      %75 = sbr.rel (0) target = $region25
    $region24: #{tpu_custom_call.1} parent=1 // pred_region
      %77 = dma.done [#allocation4], 32
    $region25: #{tpu_custom_call.1} parent=1 // pred_fallthru
      _
    %78 = vsyncpa [#allocation4], 1

</llo_original>
